<compile_context>
chip_gen: v5e
topology: v5e:2x2
jax: 0.10.0
libtpu: 0.0.40
codegen_flags: <defaults>
</compile_context>

<pallas_src>
import functools

import jax
import jax.numpy as jnp
from jax.experimental import pallas as pl
from jax.experimental.pallas import tpu as pltpu

NUM_CLASSES = 4
IGNORE_INDEX = 255
UPPER_BOUND = 1.0
SEG_WEIGHT = 1.0
EDGE_WEIGHT = 1.0
ATT_WEIGHT = 1.0
DUAL_WEIGHT = 1.0
EDGE_THRESH = 0.8

LANE = 128
SUBLANE = 8
NSPLIT = 2                      # feed both TensorCores on v7x even when N == 1
MAX_SEG_TILE_ROWS = 1024        # 1024*128 pixels/tile -> ~3 MB DMA / grid step
MAX_BCE_TILE_ROWS = 2048        # 2048*128 elements/tile -> ~2 MB DMA / grid step
VMEM_LIMIT_BYTES = 40 * 1024 * 1024  # headroom for all of v5e/v6e/v7x


def _cdiv(a, b):
    return (a + b - 1) // b


def _round_up(a, b):
    return _cdiv(a, b) * b


def _plan_tiles(rows, max_tile_rows, nsplit):
    """Pick tile rows (multiple of 8) and padded row count = nsplit*tiles*tile_rows."""
    tr = min(max_tile_rows, _round_up(max(_cdiv(rows, nsplit), 1), SUBLANE))
    tiles = max(_cdiv(rows, nsplit * tr), 1)
    return nsplit * tiles * tr, tr, tiles


def _pad_axis(x, target, axis, value):
    pad = target - x.shape[axis]
    if pad <= 0:
        return x
    cfg = [(0, 0)] * x.ndim
    cfg[axis] = (0, pad)
    return jnp.pad(x, cfg, constant_values=value)


# --------------------------------------------------------------------------- #
# Fused seg/att kernel: per-class per-lane partial sums, accumulated over HW tiles
# --------------------------------------------------------------------------- #
def _seg_att_kernel(logits_ref, tgt_ref, edge_ref, out_ref, *, num_classes, edge_thresh):
    # logits_ref : (1, C, TR, 128) f32    tgt_ref  : (1, TR, 128) i32
    # edge_ref   : (1, TR, 128) f32       out_ref  : (1, 1, 4*C, 128) f32 (accumulator)
    j = pl.program_id(2)

    @pl.when(j == 0)
    def _init():
        out_ref[...] = jnp.zeros_like(out_ref)

    t = tgt_ref[0]                                          # (TR, 128) int32
    att = (edge_ref[0] > edge_thresh).astype(jnp.float32)   # (TR, 128)

    # numerically stable log-sum-exp over the class axis, one (TR,128) slice at a
    # time (unrolled C-way max/add: pure VPU/EUP, no big (C,TR,128) temporaries).
    xs = [logits_ref[0, c] for c in range(num_classes)]
    m = xs[0]
    for c in range(1, num_classes):
        m = jnp.maximum(m, xs[c])
    se = jnp.exp(xs[0] - m)
    for c in range(1, num_classes):
        se = se + jnp.exp(xs[c] - m)
    lse = jnp.log(se) + m                                   # (TR, 128)

    # per-class, per-lane partial sums (scalar weighting happens at finalize time
    # in the wrapper: num = sum_c w_c*S_c, den = sum_c w_c*N_c)
    rows_s_seg, rows_n_seg, rows_s_att, rows_n_att = [], [], [], []
    for c in range(num_classes):
        hit = (t == c).astype(jnp.float32)                  # ignore_index never matches
        nll = (lse - xs[c]) * hit                           # -log p_c only where t == c
        rows_s_seg.append(jnp.sum(nll, axis=0, keepdims=True))
        rows_n_seg.append(jnp.sum(hit, axis=0, keepdims=True))
        rows_s_att.append(jnp.sum(nll * att, axis=0, keepdims=True))
        rows_n_att.append(jnp.sum(hit * att, axis=0, keepdims=True))

    update = jnp.concatenate(rows_s_seg + rows_n_seg + rows_s_att + rows_n_att,
                             axis=0)                        # (4*C, 128)
    out_ref[...] += update[None, None, :, :]


def _seg_att_pallas(logits, tgt, edge_max, *, tr, tps):
    N, C, rows_pad, _ = logits.shape
    kernel = functools.partial(_seg_att_kernel, num_classes=C, edge_thresh=EDGE_THRESH)
    return pl.pallas_call(
        kernel,
        out_shape=jax.ShapeDtypeStruct((N, NSPLIT, 4 * C, LANE), jnp.float32),
        grid=(N, NSPLIT, tps),
        in_specs=[
            pl.BlockSpec((1, C, tr, LANE), lambda i, s, j: (i, 0, s * tps + j, 0)),
            pl.BlockSpec((1, tr, LANE), lambda i, s, j: (i, s * tps + j, 0)),
            pl.BlockSpec((1, tr, LANE), lambda i, s, j: (i, s * tps + j, 0)),
        ],
        out_specs=pl.BlockSpec((1, 1, 4 * C, LANE), lambda i, s, j: (i, s, 0, 0)),
        compiler_params=pltpu.CompilerParams(
            dimension_semantics=("parallel", "parallel", "arbitrary"),
            vmem_limit_bytes=VMEM_LIMIT_BYTES),
    )(logits, tgt, edge_max)


def _image_weighted_nll(sums, counts):
    # ImageBasedCrossEntropyLoss2d weight: hist = N_c/total, w_c = (N_c!=0)*ub*(1-hist)+1
    # NLLLoss(size_average=True, weight=w): sum_c w_c*S_c / sum_c w_c*N_c
    total = jnp.sum(counts, axis=-1, keepdims=True)
    hist = counts / jnp.maximum(total, 1.0)
    w = jnp.where(counts > 0.0, UPPER_BOUND * (1.0 - hist), 0.0) + 1.0
    num = jnp.sum(w * sums, axis=-1)
    den = jnp.sum(w * counts, axis=-1)
    return num / jnp.maximum(den, 1e-12)   # guarded: PyTorch would NaN on all-ignore


# --------------------------------------------------------------------------- #
# Tiled one-pass class-balanced BCE-with-logits (bce2d / edge_loss)
# --------------------------------------------------------------------------- #
def _bce2d_kernel(x_ref, t_ref, out_ref):
    # x_ref, t_ref : (1, TR, 128) f32 ; out_ref : (1, 4, 128) f32 accumulator
    # rows: 0 pos_count, 1 neg_count, 2 sum of BCE over pos, 3 sum of BCE over neg
    j = pl.program_id(1)

    @pl.when(j == 0)
    def _init():
        out_ref[...] = jnp.zeros_like(out_ref)

    x = x_ref[0]
    t = t_ref[0]
    pos = (t == 1.0).astype(jnp.float32)
    neg = (t == 0.0).astype(jnp.float32)          # padding / ignore (t>1) hits neither
    sp = jnp.log(1.0 + jnp.exp(-jnp.abs(x)))      # stable log(1+exp(-|x|))
    bce_pos = jnp.maximum(-x, 0.0) + sp           # BCE-with-logits, target 1
    bce_neg = jnp.maximum(x, 0.0) + sp            # BCE-with-logits, target 0
    update = jnp.concatenate([
        jnp.sum(pos, axis=0, keepdims=True),
        jnp.sum(neg, axis=0, keepdims=True),
        jnp.sum(pos * bce_pos, axis=0, keepdims=True),
        jnp.sum(neg * bce_neg, axis=0, keepdims=True),
    ], axis=0)                                    # (4, 128)
    out_ref[...] += update[None, :, :]


def _bce2d_pallas(x, t, *, tr, tps):
    ns = x.shape[0]
    return pl.pallas_call(
        _bce2d_kernel,
        out_shape=jax.ShapeDtypeStruct((ns, 4, LANE), jnp.float32),
        grid=(ns, tps),
        in_specs=[
            pl.BlockSpec((1, tr, LANE), lambda s, j: (s, j, 0)),
            pl.BlockSpec((1, tr, LANE), lambda s, j: (s, j, 0)),
        ],
        out_specs=pl.BlockSpec((1, 4, LANE), lambda s, j: (s, 0, 0)),
        compiler_params=pltpu.CompilerParams(
            dimension_semantics=("parallel", "arbitrary"),
            vmem_limit_bytes=VMEM_LIMIT_BYTES),
    )(x, t)


# --------------------------------------------------------------------------- #
# JointEdgeSegLoss forward
# --------------------------------------------------------------------------- #
def joint_edge_seg_loss(segin, edgein, segmask, edgemask):
    N, C, H, W = segin.shape
    HW = H * W

    # ---- fused seg_loss + att_loss --------------------------------------- #
    rows = _cdiv(HW, LANE)
    rows_pad, tr, tps = _plan_tiles(rows, MAX_SEG_TILE_ROWS, NSPLIT)
    px_pad = rows_pad * LANE

    logits = segin.astype(jnp.float32).reshape(N, C, HW)
    logits = _pad_axis(logits, px_pad, 2, 0.0).reshape(N, C, rows_pad, LANE)
    tgt = segmask.astype(jnp.int32).reshape(N, HW)
    tgt = _pad_axis(tgt, px_pad, 1, IGNORE_INDEX).reshape(N, rows_pad, LANE)
    edge_max = jnp.max(edgein.astype(jnp.float32), axis=1).reshape(N, HW)
    edge_max = _pad_axis(edge_max, px_pad, 1, 0.0).reshape(N, rows_pad, LANE)

    acc = _seg_att_pallas(logits, tgt, edge_max, tr=tr, tps=tps)
    acc = acc.reshape(N, NSPLIT, 4, C, LANE).sum(axis=(1, 4))   # (N, 4, C)
    seg_per_img = _image_weighted_nll(acc[:, 0], acc[:, 1])
    att_per_img = _image_weighted_nll(acc[:, 2], acc[:, 3])

    # ---- edge_loss (bce2d) ------------------------------------------------ #
    # The class-balanced BCE is an order-independent reduction, so we skip the
    # reference NHWC transpose/view copies and flatten in native memory order.
    M = edgein.size
    rows_e = _cdiv(M, LANE)
    rows_e_pad, tr_e, tps_e = _plan_tiles(rows_e, MAX_BCE_TILE_ROWS, NSPLIT)
    m_pad = rows_e_pad * LANE
    x_e = _pad_axis(edgein.astype(jnp.float32).reshape(M), m_pad, 0, 0.0)
    t_e = _pad_axis(edgemask.astype(jnp.float32).reshape(M), m_pad, 0, 2.0)  # pad=ignore
    x_e = x_e.reshape(NSPLIT, rows_e_pad // NSPLIT, LANE)
    t_e = t_e.reshape(NSPLIT, rows_e_pad // NSPLIT, LANE)

    bce_acc = _bce2d_pallas(x_e, t_e, tr=tr_e, tps=tps_e)       # (NSPLIT, 4, 128)
    tot = bce_acc.sum(axis=(0, 2))                              # (4,)
    pos_num, neg_num, s_pos, s_neg = tot[0], tot[1], tot[2], tot[3]
    sum_num = jnp.maximum(pos_num + neg_num, 1.0)
    edge_loss = (neg_num * s_pos + pos_num * s_neg) / sum_num / float(M)

    return {
        "seg_loss": SEG_WEIGHT * jnp.sum(seg_per_img),
        "edge_loss": EDGE_WEIGHT * 20.0 * edge_loss,
        "att_loss": ATT_WEIGHT * jnp.sum(att_per_img),
        # TODO(synk): DualTaskLoss definition not provided in the reference module.
        "dual_loss": DUAL_WEIGHT * jnp.float32(0.0),
    }


# --------------------------------------------------------------------------- #
# Pure-JAX reference of the same forward (for self-check only)
# --------------------------------------------------------------------------- #
def _reference_losses(segin, edgein, segmask, edgemask):
    N, C, H, W = segin.shape
    logits = segin.reshape(N, C, -1).astype(jnp.float32)
    tgt = segmask.reshape(N, -1).astype(jnp.int32)
    edge_max = jnp.max(edgein.astype(jnp.float32), axis=1).reshape(N, -1)
    logp = jax.nn.log_softmax(logits, axis=1)

    def per_image(logp_i, t_i):
        onehot = (t_i[None, :] == jnp.arange(C)[:, None]).astype(jnp.float32)
        counts = onehot.sum(-1)
        total = jnp.maximum(counts.sum(), 1.0)
        hist = counts / total
        w = jnp.where(counts > 0.0, UPPER_BOUND * (1.0 - hist), 0.0) + 1.0
        nll = -(onehot * logp_i).sum(0)
        w_pix = (w[:, None] * onehot).sum(0)
        return (w_pix * nll).sum() / jnp.maximum(w_pix.sum(), 1e-12)

    seg = sum(per_image(logp[i], tgt[i]) for i in range(N))
    t_att = jnp.where(edge_max > EDGE_THRESH, tgt, IGNORE_INDEX)
    att = sum(per_image(logp[i], t_att[i]) for i in range(N))

    x = edgein.reshape(-1).astype(jnp.float32)
    te = edgemask.reshape(-1).astype(jnp.float32)
    pos = (te == 1.0).astype(jnp.float32)
    neg = (te == 0.0).astype(jnp.float32)
    pos_num, neg_num = pos.sum(), neg.sum()
    sum_num = jnp.maximum(pos_num + neg_num, 1.0)
    w = pos * (neg_num / sum_num) + neg * (pos_num / sum_num)
    bce = jnp.maximum(x, 0.0) - x * te + jnp.log(1.0 + jnp.exp(-jnp.abs(x)))
    edge = (w * bce).sum() / x.size

    return {
        "seg_loss": SEG_WEIGHT * seg,
        "edge_loss": EDGE_WEIGHT * 20.0 * edge,
        "att_loss": ATT_WEIGHT * att,
        "dual_loss": jnp.float32(0.0),
    }


if __name__ == "__main__":
    key = jax.random.PRNGKey(0)
    k1, k2, k3, k4, k5 = jax.random.split(key, 5)

    N, C, H, W = 2, NUM_CLASSES, 16, 16
    segin = jax.random.normal(k1, (N, C, H, W), jnp.float32)
    edgein = jax.random.normal(k2, (N, 1, H, W), jnp.float32)
    segmask = jax.random.randint(k3, (N, H, W), 0, C).astype(jnp.int32)
    # sprinkle some ignore_index pixels
    segmask = jnp.where(jax.random.uniform(k4, (N, H, W)) < 0.1, IGNORE_INDEX, segmask)
    edgemask = (jax.random.uniform(k5, (N, 1, H, W)) < 0.3).astype(jnp.float32)

    losses = jax.jit(joint_edge_seg_loss)(segin, edgein, segmask, edgemask)
    losses = jax.tree_util.tree_map(jax.block_until_ready, losses)

    # self-check against the pure-JAX reference of the same forward
    ref = _reference_losses(segin, edgein, segmask, edgemask)
    for name in ("seg_loss", "edge_loss", "att_loss", "dual_loss"):
        a, b = float(losses[name]), float(ref[name])
        assert abs(a - b) <= 1e-4 + 1e-4 * abs(b), (name, a, b)

    print("KERNEL_OK")
</pallas_src>

<mosaic_0001>
module attributes {stable_mosaic.version = 11 : i64} {
  func.func @_seg_att_kernel(%arg0: i32, %arg1: i32, %arg2: i32, %arg3: memref<1x4x8x128xf32, #tpu.memory_space<vmem>>, %arg4: memref<1x8x128xi32, #tpu.memory_space<vmem>>, %arg5: memref<1x8x128xf32, #tpu.memory_space<vmem>>, %arg6: memref<1x1x16x128xf32, #tpu.memory_space<vmem>>) attributes {dimension_semantics = [#tpu.dimension_semantics<parallel>, #tpu.dimension_semantics<parallel>, #tpu.dimension_semantics<arbitrary>], iteration_bounds = array<i64: 2, 2, 1>, scalar_prefetch = 0 : i64, scratch_operands = 0 : i64, tpu.core_type = #tpu.core_type<tc>, window_params = [{transform_indices = @transform_0, window_bounds = array<i64: 1, 4, 8, 128>}, {transform_indices = @transform_1, window_bounds = array<i64: 1, 8, 128>}, {transform_indices = @transform_2, window_bounds = array<i64: 1, 8, 128>}, {transform_indices = @transform_3, window_bounds = array<i64: 1, 1, 16, 128>}]} {
    %c0_i32 = arith.constant 0 : i32
    %0 = arith.cmpi eq, %arg2, %c0_i32 : i32
    %1 = arith.extui %0 : i1 to i32
    %c0_i32_0 = arith.constant 0 : i32
    %2 = arith.cmpi ne, %1, %c0_i32_0 : i32
    scf.if %2 {
      %cst_44 = arith.constant 0.000000e+00 : f32
      %104 = vector.broadcast %cst_44 : f32 to vector<1x1x16x128xf32>
      %c0_45 = arith.constant 0 : index
      %c0_46 = arith.constant 0 : index
      %c0_47 = arith.constant 0 : index
      %c0_48 = arith.constant 0 : index
      %105 = vector.load %arg6[%c0_45, %c0_46, %c0_47, %c0_48] : memref<1x1x16x128xf32, #tpu.memory_space<vmem>>, vector<1x1x16x128xf32>
      tpu.vector_store %arg6[%c0_45, %c0_46, %c0_47, %c0_48], %104 {strides = array<i32>} : memref<1x1x16x128xf32, #tpu.memory_space<vmem>>, vector<1x1x16x128xf32>,
    } else {
    }
    %c0 = arith.constant 0 : index
    %c0_1 = arith.constant 0 : index
    %c0_2 = arith.constant 0 : index
    %3 = vector.load %arg4[%c0, %c0_1, %c0_2] : memref<1x8x128xi32, #tpu.memory_space<vmem>>, vector<1x8x128xi32>
    %4 = vector.shape_cast %3 : vector<1x8x128xi32> to vector<8x128xi32>
    %c0_3 = arith.constant 0 : index
    %c0_4 = arith.constant 0 : index
    %c0_5 = arith.constant 0 : index
    %5 = vector.load %arg5[%c0_3, %c0_4, %c0_5] : memref<1x8x128xf32, #tpu.memory_space<vmem>>, vector<1x8x128xf32>
    %6 = vector.shape_cast %5 : vector<1x8x128xf32> to vector<8x128xf32>
    %cst = arith.constant 8.000000e-01 : f32
    %7 = vector.broadcast %cst : f32 to vector<8x128xf32>
    %8 = arith.cmpf ogt, %6, %7 : vector<8x128xf32>
    %9 = arith.extui %8 : vector<8x128xi1> to vector<8x128xi32>
    %10 = arith.sitofp %9 : vector<8x128xi32> to vector<8x128xf32>
    %c0_6 = arith.constant 0 : index
    %c0_7 = arith.constant 0 : index
    %c0_8 = arith.constant 0 : index
    %c0_9 = arith.constant 0 : index
    %11 = vector.load %arg3[%c0_6, %c0_7, %c0_8, %c0_9] : memref<1x4x8x128xf32, #tpu.memory_space<vmem>>, vector<1x1x8x128xf32>
    %12 = vector.shape_cast %11 : vector<1x1x8x128xf32> to vector<8x128xf32>
    %c0_10 = arith.constant 0 : index
    %c1 = arith.constant 1 : index
    %c0_11 = arith.constant 0 : index
    %c0_12 = arith.constant 0 : index
    %13 = vector.load %arg3[%c0_10, %c1, %c0_11, %c0_12] : memref<1x4x8x128xf32, #tpu.memory_space<vmem>>, vector<1x1x8x128xf32>
    %14 = vector.shape_cast %13 : vector<1x1x8x128xf32> to vector<8x128xf32>
    %c0_13 = arith.constant 0 : index
    %c2 = arith.constant 2 : index
    %c0_14 = arith.constant 0 : index
    %c0_15 = arith.constant 0 : index
    %15 = vector.load %arg3[%c0_13, %c2, %c0_14, %c0_15] : memref<1x4x8x128xf32, #tpu.memory_space<vmem>>, vector<1x1x8x128xf32>
    %16 = vector.shape_cast %15 : vector<1x1x8x128xf32> to vector<8x128xf32>
    %c0_16 = arith.constant 0 : index
    %c3 = arith.constant 3 : index
    %c0_17 = arith.constant 0 : index
    %c0_18 = arith.constant 0 : index
    %17 = vector.load %arg3[%c0_16, %c3, %c0_17, %c0_18] : memref<1x4x8x128xf32, #tpu.memory_space<vmem>>, vector<1x1x8x128xf32>
    %18 = vector.shape_cast %17 : vector<1x1x8x128xf32> to vector<8x128xf32>
    %19 = arith.maximumf %12, %14 : vector<8x128xf32>
    %20 = arith.maximumf %19, %16 : vector<8x128xf32>
    %21 = arith.maximumf %20, %18 : vector<8x128xf32>
    %22 = arith.subf %12, %21 : vector<8x128xf32>
    %23 = math.exp %22 : vector<8x128xf32>
    %24 = arith.subf %14, %21 : vector<8x128xf32>
    %25 = math.exp %24 : vector<8x128xf32>
    %26 = arith.addf %23, %25 : vector<8x128xf32>
    %27 = arith.subf %16, %21 : vector<8x128xf32>
    %28 = math.exp %27 : vector<8x128xf32>
    %29 = arith.addf %26, %28 : vector<8x128xf32>
    %30 = arith.subf %18, %21 : vector<8x128xf32>
    %31 = math.exp %30 : vector<8x128xf32>
    %32 = arith.addf %29, %31 : vector<8x128xf32>
    %33 = math.log %32 : vector<8x128xf32>
    %34 = arith.addf %33, %21 : vector<8x128xf32>
    %c0_i32_19 = arith.constant 0 : i32
    %35 = vector.broadcast %c0_i32_19 : i32 to vector<8x128xi32>
    %36 = arith.cmpi eq, %4, %35 : vector<8x128xi32>
    %37 = arith.extui %36 : vector<8x128xi1> to vector<8x128xi32>
    %38 = arith.sitofp %37 : vector<8x128xi32> to vector<8x128xf32>
    %39 = arith.subf %34, %12 : vector<8x128xf32>
    %40 = arith.mulf %39, %38 : vector<8x128xf32>
    %cst_20 = arith.constant dense<0.000000e+00> : vector<128xf32>
    %41 = vector.multi_reduction <add>, %40, %cst_20 [0] : vector<8x128xf32> to vector<128xf32>
    %42 = vector.shape_cast %41 : vector<128xf32> to vector<1x128xf32>
    %cst_21 = arith.constant dense<0.000000e+00> : vector<128xf32>
    %43 = vector.multi_reduction <add>, %38, %cst_21 [0] : vector<8x128xf32> to vector<128xf32>
    %44 = vector.shape_cast %43 : vector<128xf32> to vector<1x128xf32>
    %45 = arith.mulf %40, %10 : vector<8x128xf32>
    %cst_22 = arith.constant dense<0.000000e+00> : vector<128xf32>
    %46 = vector.multi_reduction <add>, %45, %cst_22 [0] : vector<8x128xf32> to vector<128xf32>
    %47 = vector.shape_cast %46 : vector<128xf32> to vector<1x128xf32>
    %48 = arith.mulf %38, %10 : vector<8x128xf32>
    %cst_23 = arith.constant dense<0.000000e+00> : vector<128xf32>
    %49 = vector.multi_reduction <add>, %48, %cst_23 [0] : vector<8x128xf32> to vector<128xf32>
    %50 = vector.shape_cast %49 : vector<128xf32> to vector<1x128xf32>
    %c1_i32 = arith.constant 1 : i32
    %51 = vector.broadcast %c1_i32 : i32 to vector<8x128xi32>
    %52 = arith.cmpi eq, %4, %51 : vector<8x128xi32>
    %53 = arith.extui %52 : vector<8x128xi1> to vector<8x128xi32>
    %54 = arith.sitofp %53 : vector<8x128xi32> to vector<8x128xf32>
    %55 = arith.subf %34, %14 : vector<8x128xf32>
    %56 = arith.mulf %55, %54 : vector<8x128xf32>
    %cst_24 = arith.constant dense<0.000000e+00> : vector<128xf32>
    %57 = vector.multi_reduction <add>, %56, %cst_24 [0] : vector<8x128xf32> to vector<128xf32>
    %58 = vector.shape_cast %57 : vector<128xf32> to vector<1x128xf32>
    %cst_25 = arith.constant dense<0.000000e+00> : vector<128xf32>
    %59 = vector.multi_reduction <add>, %54, %cst_25 [0] : vector<8x128xf32> to vector<128xf32>
    %60 = vector.shape_cast %59 : vector<128xf32> to vector<1x128xf32>
    %61 = arith.mulf %56, %10 : vector<8x128xf32>
    %cst_26 = arith.constant dense<0.000000e+00> : vector<128xf32>
    %62 = vector.multi_reduction <add>, %61, %cst_26 [0] : vector<8x128xf32> to vector<128xf32>
    %63 = vector.shape_cast %62 : vector<128xf32> to vector<1x128xf32>
    %64 = arith.mulf %54, %10 : vector<8x128xf32>
    %cst_27 = arith.constant dense<0.000000e+00> : vector<128xf32>
    %65 = vector.multi_reduction <add>, %64, %cst_27 [0] : vector<8x128xf32> to vector<128xf32>
    %66 = vector.shape_cast %65 : vector<128xf32> to vector<1x128xf32>
    %c2_i32 = arith.constant 2 : i32
    %67 = vector.broadcast %c2_i32 : i32 to vector<8x128xi32>
    %68 = arith.cmpi eq, %4, %67 : vector<8x128xi32>
    %69 = arith.extui %68 : vector<8x128xi1> to vector<8x128xi32>
    %70 = arith.sitofp %69 : vector<8x128xi32> to vector<8x128xf32>
    %71 = arith.subf %34, %16 : vector<8x128xf32>
    %72 = arith.mulf %71, %70 : vector<8x128xf32>
    %cst_28 = arith.constant dense<0.000000e+00> : vector<128xf32>
    %73 = vector.multi_reduction <add>, %72, %cst_28 [0] : vector<8x128xf32> to vector<128xf32>
    %74 = vector.shape_cast %73 : vector<128xf32> to vector<1x128xf32>
    %cst_29 = arith.constant dense<0.000000e+00> : vector<128xf32>
    %75 = vector.multi_reduction <add>, %70, %cst_29 [0] : vector<8x128xf32> to vector<128xf32>
    %76 = vector.shape_cast %75 : vector<128xf32> to vector<1x128xf32>
    %77 = arith.mulf %72, %10 : vector<8x128xf32>
    %cst_30 = arith.constant dense<0.000000e+00> : vector<128xf32>
    %78 = vector.multi_reduction <add>, %77, %cst_30 [0] : vector<8x128xf32> to vector<128xf32>
    %79 = vector.shape_cast %78 : vector<128xf32> to vector<1x128xf32>
    %80 = arith.mulf %70, %10 : vector<8x128xf32>
    %cst_31 = arith.constant dense<0.000000e+00> : vector<128xf32>
    %81 = vector.multi_reduction <add>, %80, %cst_31 [0] : vector<8x128xf32> to vector<128xf32>
    %82 = vector.shape_cast %81 : vector<128xf32> to vector<1x128xf32>
    %c3_i32 = arith.constant 3 : i32
    %83 = vector.broadcast %c3_i32 : i32 to vector<8x128xi32>
    %84 = arith.cmpi eq, %4, %83 : vector<8x128xi32>
    %85 = arith.extui %84 : vector<8x128xi1> to vector<8x128xi32>
    %86 = arith.sitofp %85 : vector<8x128xi32> to vector<8x128xf32>
    %87 = arith.subf %34, %18 : vector<8x128xf32>
    %88 = arith.mulf %87, %86 : vector<8x128xf32>
    %cst_32 = arith.constant dense<0.000000e+00> : vector<128xf32>
    %89 = vector.multi_reduction <add>, %88, %cst_32 [0] : vector<8x128xf32> to vector<128xf32>
    %90 = vector.shape_cast %89 : vector<128xf32> to vector<1x128xf32>
    %cst_33 = arith.constant dense<0.000000e+00> : vector<128xf32>
    %91 = vector.multi_reduction <add>, %86, %cst_33 [0] : vector<8x128xf32> to vector<128xf32>
    %92 = vector.shape_cast %91 : vector<128xf32> to vector<1x128xf32>
    %93 = arith.mulf %88, %10 : vector<8x128xf32>
    %cst_34 = arith.constant dense<0.000000e+00> : vector<128xf32>
    %94 = vector.multi_reduction <add>, %93, %cst_34 [0] : vector<8x128xf32> to vector<128xf32>
    %95 = vector.shape_cast %94 : vector<128xf32> to vector<1x128xf32>
    %96 = arith.mulf %86, %10 : vector<8x128xf32>
    %cst_35 = arith.constant dense<0.000000e+00> : vector<128xf32>
    %97 = vector.multi_reduction <add>, %96, %cst_35 [0] : vector<8x128xf32> to vector<128xf32>
    %98 = vector.shape_cast %97 : vector<128xf32> to vector<1x128xf32>
    %99 = tpu.concatenate %42, %58, %74, %90, %44, %60, %76, %92, %47, %63, %79, %95, %50, %66, %82, %98 in 0 : vector<1x128xf32>, vector<1x128xf32>, vector<1x128xf32>, vector<1x128xf32>, vector<1x128xf32>, vector<1x128xf32>, vector<1x128xf32>, vector<1x128xf32>, vector<1x128xf32>, vector<1x128xf32>, vector<1x128xf32>, vector<1x128xf32>, vector<1x128xf32>, vector<1x128xf32>, vector<1x128xf32>, vector<1x128xf32> -> vector<16x128xf32>
    %c0_36 = arith.constant 0 : index
    %c0_37 = arith.constant 0 : index
    %c0_38 = arith.constant 0 : index
    %c0_39 = arith.constant 0 : index
    %100 = vector.load %arg6[%c0_36, %c0_37, %c0_38, %c0_39] : memref<1x1x16x128xf32, #tpu.memory_space<vmem>>, vector<1x1x16x128xf32>
    %101 = vector.shape_cast %99 : vector<16x128xf32> to vector<1x1x16x128xf32>
    %102 = arith.addf %100, %101 : vector<1x1x16x128xf32>
    %c0_40 = arith.constant 0 : index
    %c0_41 = arith.constant 0 : index
    %c0_42 = arith.constant 0 : index
    %c0_43 = arith.constant 0 : index
    %103 = vector.load %arg6[%c0_40, %c0_41, %c0_42, %c0_43] : memref<1x1x16x128xf32, #tpu.memory_space<vmem>>, vector<1x1x16x128xf32>
    tpu.vector_store %arg6[%c0_40, %c0_41, %c0_42, %c0_43], %102 {strides = array<i32>} : memref<1x1x16x128xf32, #tpu.memory_space<vmem>>, vector<1x1x16x128xf32>,
    return
  }
  func.func @transform_0(%arg0: i32, %arg1: i32, %arg2: i32) -> (i32, i32, i32, i32) {
    %c1_i32 = arith.constant 1 : i32
    %0 = arith.muli %arg1, %c1_i32 : i32
    %1 = arith.addi %0, %arg2 : i32
    %c0_i32 = arith.constant 0 : i32
    %c0_i32_0 = arith.constant 0 : i32
    %c0_i32_1 = arith.constant 0 : i32
    return %arg0, %c0_i32, %1, %c0_i32_0 : i32, i32, i32, i32
  }
  func.func @transform_1(%arg0: i32, %arg1: i32, %arg2: i32) -> (i32, i32, i32) {
    %c1_i32 = arith.constant 1 : i32
    %0 = arith.muli %arg1, %c1_i32 : i32
    %1 = arith.addi %0, %arg2 : i32
    %c0_i32 = arith.constant 0 : i32
    %c0_i32_0 = arith.constant 0 : i32
    return %arg0, %1, %c0_i32 : i32, i32, i32
  }
  func.func @transform_2(%arg0: i32, %arg1: i32, %arg2: i32) -> (i32, i32, i32) {
    %c1_i32 = arith.constant 1 : i32
    %0 = arith.muli %arg1, %c1_i32 : i32
    %1 = arith.addi %0, %arg2 : i32
    %c0_i32 = arith.constant 0 : i32
    %c0_i32_0 = arith.constant 0 : i32
    return %arg0, %1, %c0_i32 : i32, i32, i32
  }
  func.func @transform_3(%arg0: i32, %arg1: i32, %arg2: i32) -> (i32, i32, i32, i32) {
    %c0_i32 = arith.constant 0 : i32
    %c0_i32_0 = arith.constant 0 : i32
    %c0_i32_1 = arith.constant 0 : i32
    return %arg0, %arg1, %c0_i32, %c0_i32_0 : i32, i32, i32, i32
  }
}

module attributes {stable_mosaic.version = 11 : i64} {
  func.func @_bce2d_kernel(%arg0: i32, %arg1: i32, %arg2: memref<1x8x128xf32, #tpu.memory_space<vmem>>, %arg3: memref<1x8x128xf32, #tpu.memory_space<vmem>>, %arg4: memref<1x4x128xf32, #tpu.memory_space<vmem>>) attributes {dimension_semantics = [#tpu.dimension_semantics<parallel>, #tpu.dimension_semantics<arbitrary>], iteration_bounds = array<i64: 2, 1>, scalar_prefetch = 0 : i64, scratch_operands = 0 : i64, tpu.core_type = #tpu.core_type<tc>, window_params = [{transform_indices = @transform_0, window_bounds = array<i64: 1, 8, 128>}, {transform_indices = @transform_1, window_bounds = array<i64: 1, 8, 128>}, {transform_indices = @transform_2, window_bounds = array<i64: 1, 4, 128>}]} {
    %c0_i32 = arith.constant 0 : i32
    %0 = arith.cmpi eq, %arg1, %c0_i32 : i32
    %1 = arith.extui %0 : i1 to i32
    %c0_i32_0 = arith.constant 0 : i32
    %2 = arith.cmpi ne, %1, %c0_i32_0 : i32
    scf.if %2 {
      %cst_22 = arith.constant 0.000000e+00 : f32
      %45 = vector.broadcast %cst_22 : f32 to vector<1x4x128xf32>
      %c0_23 = arith.constant 0 : index
      %c0_24 = arith.constant 0 : index
      %c0_25 = arith.constant 0 : index
      %46 = vector.load %arg4[%c0_23, %c0_24, %c0_25] : memref<1x4x128xf32, #tpu.memory_space<vmem>>, vector<1x4x128xf32>
      tpu.vector_store %arg4[%c0_23, %c0_24, %c0_25], %45 {strides = array<i32>} : memref<1x4x128xf32, #tpu.memory_space<vmem>>, vector<1x4x128xf32>,
    } else {
    }
    %c0 = arith.constant 0 : index
    %c0_1 = arith.constant 0 : index
    %c0_2 = arith.constant 0 : index
    %3 = vector.load %arg2[%c0, %c0_1, %c0_2] : memref<1x8x128xf32, #tpu.memory_space<vmem>>, vector<1x8x128xf32>
    %4 = vector.shape_cast %3 : vector<1x8x128xf32> to vector<8x128xf32>
    %c0_3 = arith.constant 0 : index
    %c0_4 = arith.constant 0 : index
    %c0_5 = arith.constant 0 : index
    %5 = vector.load %arg3[%c0_3, %c0_4, %c0_5] : memref<1x8x128xf32, #tpu.memory_space<vmem>>, vector<1x8x128xf32>
    %6 = vector.shape_cast %5 : vector<1x8x128xf32> to vector<8x128xf32>
    %cst = arith.constant 1.000000e+00 : f32
    %7 = vector.broadcast %cst : f32 to vector<8x128xf32>
    %8 = arith.cmpf oeq, %6, %7 : vector<8x128xf32>
    %9 = arith.extui %8 : vector<8x128xi1> to vector<8x128xi32>
    %10 = arith.sitofp %9 : vector<8x128xi32> to vector<8x128xf32>
    %cst_6 = arith.constant 0.000000e+00 : f32
    %11 = vector.broadcast %cst_6 : f32 to vector<8x128xf32>
    %12 = arith.cmpf oeq, %6, %11 : vector<8x128xf32>
    %13 = arith.extui %12 : vector<8x128xi1> to vector<8x128xi32>
    %14 = arith.sitofp %13 : vector<8x128xi32> to vector<8x128xf32>
    %15 = math.absf %4 : vector<8x128xf32>
    %cst_7 = arith.constant 0.000000e+00 : f32
    %16 = vector.broadcast %cst_7 : f32 to vector<8x128xf32>
    %17 = arith.subf %16, %15 : vector<8x128xf32>
    %18 = math.exp %17 : vector<8x128xf32>
    %cst_8 = arith.constant 1.000000e+00 : f32
    %19 = vector.broadcast %cst_8 : f32 to vector<8x128xf32>
    %20 = arith.addf %19, %18 : vector<8x128xf32>
    %21 = math.log %20 : vector<8x128xf32>
    %cst_9 = arith.constant 0.000000e+00 : f32
    %22 = vector.broadcast %cst_9 : f32 to vector<8x128xf32>
    %23 = arith.subf %22, %4 : vector<8x128xf32>
    %cst_10 = arith.constant 0.000000e+00 : f32
    %24 = vector.broadcast %cst_10 : f32 to vector<8x128xf32>
    %25 = arith.maximumf %23, %24 : vector<8x128xf32>
    %26 = arith.addf %25, %21 : vector<8x128xf32>
    %cst_11 = arith.constant 0.000000e+00 : f32
    %27 = vector.broadcast %cst_11 : f32 to vector<8x128xf32>
    %28 = arith.maximumf %4, %27 : vector<8x128xf32>
    %29 = arith.addf %28, %21 : vector<8x128xf32>
    %cst_12 = arith.constant dense<0.000000e+00> : vector<128xf32>
    %30 = vector.multi_reduction <add>, %10, %cst_12 [0] : vector<8x128xf32> to vector<128xf32>
    %31 = vector.shape_cast %30 : vector<128xf32> to vector<1x128xf32>
    %cst_13 = arith.constant dense<0.000000e+00> : vector<128xf32>
    %32 = vector.multi_reduction <add>, %14, %cst_13 [0] : vector<8x128xf32> to vector<128xf32>
    %33 = vector.shape_cast %32 : vector<128xf32> to vector<1x128xf32>
    %34 = arith.mulf %10, %26 : vector<8x128xf32>
    %cst_14 = arith.constant dense<0.000000e+00> : vector<128xf32>
    %35 = vector.multi_reduction <add>, %34, %cst_14 [0] : vector<8x128xf32> to vector<128xf32>
    %36 = vector.shape_cast %35 : vector<128xf32> to vector<1x128xf32>
    %37 = arith.mulf %14, %29 : vector<8x128xf32>
    %cst_15 = arith.constant dense<0.000000e+00> : vector<128xf32>
    %38 = vector.multi_reduction <add>, %37, %cst_15 [0] : vector<8x128xf32> to vector<128xf32>
    %39 = vector.shape_cast %38 : vector<128xf32> to vector<1x128xf32>
    %40 = tpu.concatenate %31, %33, %36, %39 in 0 : vector<1x128xf32>, vector<1x128xf32>, vector<1x128xf32>, vector<1x128xf32> -> vector<4x128xf32>
    %c0_16 = arith.constant 0 : index
    %c0_17 = arith.constant 0 : index
    %c0_18 = arith.constant 0 : index
    %41 = vector.load %arg4[%c0_16, %c0_17, %c0_18] : memref<1x4x128xf32, #tpu.memory_space<vmem>>, vector<1x4x128xf32>
    %42 = vector.shape_cast %40 : vector<4x128xf32> to vector<1x4x128xf32>
    %43 = arith.addf %41, %42 : vector<1x4x128xf32>
    %c0_19 = arith.constant 0 : index
    %c0_20 = arith.constant 0 : index
    %c0_21 = arith.constant 0 : index
    %44 = vector.load %arg4[%c0_19, %c0_20, %c0_21] : memref<1x4x128xf32, #tpu.memory_space<vmem>>, vector<1x4x128xf32>
    tpu.vector_store %arg4[%c0_19, %c0_20, %c0_21], %43 {strides = array<i32>} : memref<1x4x128xf32, #tpu.memory_space<vmem>>, vector<1x4x128xf32>,
    return
  }
  func.func @transform_0(%arg0: i32, %arg1: i32) -> (i32, i32, i32) {
    %c0_i32 = arith.constant 0 : i32
    %c0_i32_0 = arith.constant 0 : i32
    return %arg0, %arg1, %c0_i32 : i32, i32, i32
  }
  func.func @transform_1(%arg0: i32, %arg1: i32) -> (i32, i32, i32) {
    %c0_i32 = arith.constant 0 : i32
    %c0_i32_0 = arith.constant 0 : i32
    return %arg0, %arg1, %c0_i32 : i32, i32, i32
  }
  func.func @transform_2(%arg0: i32, %arg1: i32) -> (i32, i32, i32) {
    %c0_i32 = arith.constant 0 : i32
    %c0_i32_0 = arith.constant 0 : i32
    %c0_i32_1 = arith.constant 0 : i32
    return %arg0, %c0_i32, %c0_i32_0 : i32, i32, i32
  }
}

</mosaic_0001>

<llo_original>
// kernel: joint_edge_seg_loss.2
$region0: #{joint_edge_seg_loss.2}
  #allocation0 [shape = 'u32[]', space=smem, size = 0x4, offset = 0x4, fixed_abs, tag = 'smem constant byte address 0x4 - core index']
  #allocation1 [shape = 'u32[72,128]{1,0:T(1,128)}', space=vmem, size = 0x9000, scoped, tag = 'internal scratch']
  %s0 = inlined_call_operand.vmem [shape: f32[2,4,16,128], index: 0, kind: input, shape index: {}]
  %s1 = inlined_call_operand.vmem [shape: s32[2,16,128], index: 1, kind: input, shape index: {}]
  %s2 = inlined_call_operand.vmem [shape: f32[2,16,128], index: 2, kind: input, shape index: {}]
  %s3 = inlined_call_operand.vmem [shape: f32[2,2,16,128], index: 3, kind: output, shape index: {}]
  %s4 = sld [smem:[#allocation0]]
  $region87: #{joint_edge_seg_loss.2} parent=0
    _
  %s6 = ssub.s32 1, %s4
  %s7 = scalar_select 0, %s6, %s4
  $region1: #{joint_edge_seg_loss.2} parent=0
    #allocation2 [shape = 'u8[32768]{0}', space=vmem, size = 0x8000, scoped, tag = 'input window, operand 0']
    loop: start=0, step=1, limit=6
    $region2: #{joint_edge_seg_loss.2} parent=1 // loop_pre_header
      _
    $region3: #{joint_edge_seg_loss.2} parent=1 // loop_header
      %s9 = sphi 0, %s13
      %p10 = scmp.ge.s32.totalorder %s9, 6
      %s16 = sphi 0, %s35
      %s17 = sphi 0, %s31
      %s18 = sphi 0, %s27
      %s19 = sphi 0, %s16
      %s20 = sphi 0, %s17
      %s21 = sphi 0, %s18
      %s22 = sphi 0, %s19
      %s23 = sphi 0, %s20
      %s24 = sphi 0, %s21
      %s42 = sphi 0, %s44
      %s45 = sphi 0, %s42
      %s46 = sphi 0, %s45
      %s62 = sphi 0, %s46
      %s72 = sphi 0, %s74
      %s75 = sphi 0, %s72
      %s76 = sphi 0, %s75
      %s92 = sphi 0, %s76
      %s102 = sphi 0, %s104
      %s105 = sphi 0, %s102
      %s106 = sphi 0, %s105
      %s122 = sphi 0, %s106
      %s130 = sphi 0, %s132
      %s133 = sphi 0, %s130
      %s134 = sphi 0, %s133
      %s150 = sphi 0, %s134
    $region4: #{joint_edge_seg_loss.2} parent=1 // loop_header_branch
      %12 = sbr.rel (%p10) target = $region8
    $region5: #{joint_edge_seg_loss.2} parent=1 // loop_body
      %s14 = ssub.s32 %s9, 1
      %s15 = ssub.s32 %s9, 2
      %s25 = sadd.s32 1, %s18
      %p26 = scmp.ge.s32.totalorder %s25, 1
      %s27 = scalar_select %p26, 0, %s25
      %s28 = sadd.s32 1, %s17
      %s29 = scalar_select %p26, %s28, %s17
      %p30 = scmp.ge.s32.totalorder %s29, 2
      %s31 = scalar_select %p30, 0, %s29
      %s32 = sadd.s32 1, %s16
      %s33 = scalar_select %p30, %s32, %s16
      %p34 = scmp.ge.s32.totalorder %s33, 2
      %s35 = scalar_select %p34, 0, %s33
      %s36 = sadd.s32 %s17, %s18
      %s37 = sadd.s32 %s31, %s27
      %s38 = ssub.s32 %s16, %s35
      %s39 = ssub.s32 %s36, %s37
      %s40 = sor.u32 %s38, %s39
      %p41 = scmp.eq.s32.totalorder %s40, 0
      %s43 = sadd.s32 %s42, 1
      %s44 = scalar_select %p41, %s42, %s43
      %p47 = pneg %p41
      %p48 = scmp.eq.s32.totalorder %s9, 3
      %p49 = por %p47, %p48
      %p50 = scmp.ne.s32.totalorder %s42, %s45
      %p51 = scmp.eq.s32.totalorder %s9, 0
      %p52 = por %p50, %p51
      %p53 = scmp.ne.s32.totalorder %s42, %s45
      %p54 = scmp.eq.s32.totalorder %s14, 3
      %p55 = por %p53, %p54
      %p56 = scmp.ne.s32.totalorder %s45, %s46
      %p57 = scmp.eq.s32.totalorder %s14, 0
      %p58 = por %p56, %p57
      %p59 = scmp.ne.s32.totalorder %s45, %s46
      %p60 = scmp.eq.s32.totalorder %s15, 3
      %p61 = por %p59, %p60
      %p63 = scmp.ne.s32.totalorder %s46, %s62
      %p64 = scmp.eq.s32.totalorder %s15, 0
      %p65 = por %p63, %p64
      %s66 = sadd.s32 %s17, %s18
      %s67 = sadd.s32 %s31, %s27
      %s68 = ssub.s32 %s16, %s35
      %s69 = ssub.s32 %s66, %s67
      %s70 = sor.u32 %s68, %s69
      %p71 = scmp.eq.s32.totalorder %s70, 0
      %s73 = sadd.s32 %s72, 1
      %s74 = scalar_select %p71, %s72, %s73
      %p77 = pneg %p71
      %p78 = scmp.eq.s32.totalorder %s9, 3
      %p79 = por %p77, %p78
      %p80 = scmp.ne.s32.totalorder %s72, %s75
      %p81 = scmp.eq.s32.totalorder %s9, 0
      %p82 = por %p80, %p81
      %p83 = scmp.ne.s32.totalorder %s72, %s75
      %p84 = scmp.eq.s32.totalorder %s14, 3
      %p85 = por %p83, %p84
      %p86 = scmp.ne.s32.totalorder %s75, %s76
      %p87 = scmp.eq.s32.totalorder %s14, 0
      %p88 = por %p86, %p87
      %p89 = scmp.ne.s32.totalorder %s75, %s76
      %p90 = scmp.eq.s32.totalorder %s15, 3
      %p91 = por %p89, %p90
      %p93 = scmp.ne.s32.totalorder %s76, %s92
      %p94 = scmp.eq.s32.totalorder %s15, 0
      %p95 = por %p93, %p94
      %s96 = sadd.s32 %s17, %s18
      %s97 = sadd.s32 %s31, %s27
      %s98 = ssub.s32 %s16, %s35
      %s99 = ssub.s32 %s96, %s97
      %s100 = sor.u32 %s98, %s99
      %p101 = scmp.eq.s32.totalorder %s100, 0
      %s103 = sadd.s32 %s102, 1
      %s104 = scalar_select %p101, %s102, %s103
      %p107 = pneg %p101
      %p108 = scmp.eq.s32.totalorder %s9, 3
      %p109 = por %p107, %p108
      %p110 = scmp.ne.s32.totalorder %s102, %s105
      %p111 = scmp.eq.s32.totalorder %s9, 0
      %p112 = por %p110, %p111
      %p113 = scmp.ne.s32.totalorder %s102, %s105
      %p114 = scmp.eq.s32.totalorder %s14, 3
      %p115 = por %p113, %p114
      %p116 = scmp.ne.s32.totalorder %s105, %s106
      %p117 = scmp.eq.s32.totalorder %s14, 0
      %p118 = por %p116, %p117
      %p119 = scmp.ne.s32.totalorder %s105, %s106
      %p120 = scmp.eq.s32.totalorder %s15, 3
      %p121 = por %p119, %p120
      %p123 = scmp.ne.s32.totalorder %s106, %s122
      %p124 = scmp.eq.s32.totalorder %s15, 0
      %p125 = por %p123, %p124
      %s126 = ssub.s32 %s16, %s35
      %s127 = ssub.s32 %s17, %s31
      %s128 = sor.u32 %s126, %s127
      %p129 = scmp.eq.s32.totalorder %s128, 0
      %s131 = sadd.s32 %s130, 1
      %s132 = scalar_select %p129, %s130, %s131
      %p135 = pneg %p129
      %p136 = scmp.eq.s32.totalorder %s9, 3
      %p137 = por %p135, %p136
      %p138 = scmp.ne.s32.totalorder %s130, %s133
      %p139 = scmp.eq.s32.totalorder %s9, 0
      %p140 = por %p138, %p139
      %p141 = scmp.ne.s32.totalorder %s130, %s133
      %p142 = scmp.eq.s32.totalorder %s14, 3
      %p143 = por %p141, %p142
      %p144 = scmp.ne.s32.totalorder %s133, %s134
      %p145 = scmp.eq.s32.totalorder %s14, 0
      %p146 = por %p144, %p145
      %p147 = scmp.ne.s32.totalorder %s133, %s134
      %p148 = scmp.eq.s32.totalorder %s15, 3
      %p149 = por %p147, %p148
      %p151 = scmp.ne.s32.totalorder %s134, %s150
      %p152 = scmp.eq.s32.totalorder %s15, 0
      %p153 = por %p151, %p152
      %p154 = scmp.le.s32.totalorder 1, %s9
      %p155 = scmp.lt.s32.totalorder %s9, 5
      %p156 = pnand %p154, %p155
      %p157 = pneg %p156
      // Predicated region
      $region9: #{joint_edge_seg_loss.2} parent=5 // pred_check
        _
      $region10: #{joint_edge_seg_loss.2} parent=5 // pred_check_branch
        %159 = sbr.rel (%p156) target = $region12
      $region11: #{joint_edge_seg_loss.2} parent=5 // pred_region
        %s160 = ssub.s32 %s9, 1
      $region12: #{joint_edge_seg_loss.2} parent=5 // pred_fallthru
        _
      %p161 = scmp.lt.s32.totalorder %s9, 4
      // Predicated region
      $region13: #{joint_edge_seg_loss.2} parent=5 // pred_check
        %p162 = pneg %p161
      $region14: #{joint_edge_seg_loss.2} parent=5 // pred_check_branch
        %164 = sbr.rel (%p162) target = $region16
      $region15: #{joint_edge_seg_loss.2} parent=5 // pred_region
        // Predicated region
        $region17: #{joint_edge_seg_loss.2} parent=15 // pred_check
          %p165 = pneg %p52
        $region18: #{joint_edge_seg_loss.2} parent=15 // pred_check_branch
          %167 = sbr.rel (%p165) target = $region20
        $region19: #{joint_edge_seg_loss.2} parent=15 // pred_region
          %s168 = sand.u32 %s42, 1
          %s169 = sand.u32 %s42, 1
          %s170 = smul.addr %s169, 32
          %s171 = scalar_lea.vmem [#allocation2], %s170
          %s172 = sadd.s32 %s17, %s18
          %s173 = smul.addr %s16, 8
          %s174 = sadd.s32 %s172, %s173
          %s175 = smul.addr %s174, 8
          %s176 = scalar_lea.vmem %s0, %s175
          // Predicated region
          $region21: #{joint_edge_seg_loss.2} parent=19 // pred_check
            _
          $region22: #{joint_edge_seg_loss.2} parent=19 // pred_check_branch
            %178 = sbr.rel (0) target = $region24
          $region23: #{joint_edge_seg_loss.2} parent=19 // pred_region
            // Predicated region
            $region25: #{joint_edge_seg_loss.2} parent=23 // pred_check
              _
            $region26: #{joint_edge_seg_loss.2} parent=23 // pred_check_branch
              %180 = sbr.rel (0) target = $region28
            $region27: #{joint_edge_seg_loss.2} parent=23 // pred_region
              // Predicated region
              $region40: #{joint_edge_seg_loss.2} parent=27 // pred_check
                _
              $region41: #{joint_edge_seg_loss.2} parent=27 // pred_check_branch
                %202 = sbr.rel (0) target = $region43
              $region42: #{joint_edge_seg_loss.2} parent=27 // pred_region
                loop: start=0, step=1, limit=1
                $region44: #{joint_edge_seg_loss.2} parent=42 // loop_pre_header
                  _
                $region45: #{joint_edge_seg_loss.2} parent=42 // loop_header
                  %s204 = sphi 0, %s208
                  %p205 = scmp.ge.s32.totalorder %s204, 1
                  %s209 = sphi %s176, %s176
                  %s210 = sphi %s171, %s171
                $region46: #{joint_edge_seg_loss.2} parent=42 // loop_header_branch
                  %207 = sbr.rel (%p205) target = $region50
                $region47: #{joint_edge_seg_loss.2} parent=42 // loop_body
                  %v211 = vld [vmem:[%s209] sm:$0xff]
                  %212 = vst [vmem:[%s210] sm:$0xff] %v211
                  %v213 = vld [vmem:[%s209 + $0x10] sm:$0xff]
                  %214 = vst [vmem:[%s210 + $0x8] sm:$0xff] %v213
                  %v215 = vld [vmem:[%s209 + $0x20] sm:$0xff]
                  %216 = vst [vmem:[%s210 + $0x10] sm:$0xff] %v215
                  %v217 = vld [vmem:[%s209 + $0x30] sm:$0xff]
                  %218 = vst [vmem:[%s210 + $0x18] sm:$0xff] %v217
                $region48: #{joint_edge_seg_loss.2} parent=42 // loop_footer
                  %s208 = sadd.s32 1, %s204
                $region49: #{joint_edge_seg_loss.2} parent=42 // loop_footer_branch
                  %203 = sbr.rel target = $region45
                $region50: #{joint_edge_seg_loss.2} parent=42 // loop_exit
                  _
              $region43: #{joint_edge_seg_loss.2} parent=27 // pred_fallthru
                _
              // Predicated region
              $region51: #{joint_edge_seg_loss.2} parent=27 // pred_check
                _
              $region52: #{joint_edge_seg_loss.2} parent=27 // pred_check_branch
                %220 = sbr.rel target = $region54
              $region53: #{joint_edge_seg_loss.2} parent=27 // pred_region
                _
              $region54: #{joint_edge_seg_loss.2} parent=27 // pred_fallthru
                _
            $region28: #{joint_edge_seg_loss.2} parent=23 // pred_fallthru
              _
            // Predicated region
            $region29: #{joint_edge_seg_loss.2} parent=23 // pred_check
              _
            $region30: #{joint_edge_seg_loss.2} parent=23 // pred_check_branch
              %182 = sbr.rel target = $region32
            $region31: #{joint_edge_seg_loss.2} parent=23 // pred_region
              %s184 = ssub.s32 256, 1
              loop: start=0, step=1, limit=1
              $region33: #{joint_edge_seg_loss.2} parent=31 // loop_pre_header
                _
              $region34: #{joint_edge_seg_loss.2} parent=31 // loop_header
                %s186 = sphi 0, %s190
                %p187 = scmp.ge.s32.totalorder %s186, 1
                %s191 = sphi %s176, %s176
                %s192 = sphi %s171, %s171
              $region35: #{joint_edge_seg_loss.2} parent=31 // loop_header_branch
                %189 = sbr.rel (%p187) target = $region39
              $region36: #{joint_edge_seg_loss.2} parent=31 // loop_body
                %v193 = vld [vmem:[%s191] sm:%s184]
                %194 = vst [vmem:[%s192] sm:%s184] %v193
                %v195 = vld [vmem:[%s191 + $0x10] sm:%s184]
                %196 = vst [vmem:[%s192 + $0x8] sm:%s184] %v195
                %v197 = vld [vmem:[%s191 + $0x20] sm:%s184]
                %198 = vst [vmem:[%s192 + $0x10] sm:%s184] %v197
                %v199 = vld [vmem:[%s191 + $0x30] sm:%s184]
                %200 = vst [vmem:[%s192 + $0x18] sm:%s184] %v199
              $region37: #{joint_edge_seg_loss.2} parent=31 // loop_footer
                %s190 = sadd.s32 1, %s186
              $region38: #{joint_edge_seg_loss.2} parent=31 // loop_footer_branch
                %185 = sbr.rel target = $region34
              $region39: #{joint_edge_seg_loss.2} parent=31 // loop_exit
                _
            $region32: #{joint_edge_seg_loss.2} parent=23 // pred_fallthru
              _
          $region24: #{joint_edge_seg_loss.2} parent=19 // pred_fallthru
            _
          %221 = vnop
        $region20: #{joint_edge_seg_loss.2} parent=15 // pred_fallthru
          _
        // Predicated region
        $region55: #{joint_edge_seg_loss.2} parent=15 // pred_check
          %p222 = pneg %p82
        $region56: #{joint_edge_seg_loss.2} parent=15 // pred_check_branch
          %224 = sbr.rel (%p222) target = $region58
        $region57: #{joint_edge_seg_loss.2} parent=15 // pred_region
          %s225 = sadd.s32 %s17, %s18
          %p226 = scmp.lt.s32.totalorder %s16, 1
          %s227 = scalar_select %p226, %s16, 1
          %p228 = scmp.lt.s32.totalorder %s225, 1
          %s229 = scalar_select %p228, %s225, 1
          %s230 = smul.addr %s227, 2
          %s231 = sadd.s32 %s229, %s230
          %s232 = smul.addr %s231, 8
          %s233 = scalar_lea.vmem %s1, %s232
          %s234 = sadd.s32 %s17, %s18
        $region58: #{joint_edge_seg_loss.2} parent=15 // pred_fallthru
          _
        // Predicated region
        $region59: #{joint_edge_seg_loss.2} parent=15 // pred_check
          %p235 = pneg %p112
        $region60: #{joint_edge_seg_loss.2} parent=15 // pred_check_branch
          %237 = sbr.rel (%p235) target = $region62
        $region61: #{joint_edge_seg_loss.2} parent=15 // pred_region
          %s238 = sadd.s32 %s17, %s18
          %p239 = scmp.lt.s32.totalorder %s16, 1
          %s240 = scalar_select %p239, %s16, 1
          %p241 = scmp.lt.s32.totalorder %s238, 1
          %s242 = scalar_select %p241, %s238, 1
          %s243 = smul.addr %s240, 2
          %s244 = sadd.s32 %s242, %s243
          %s245 = smul.addr %s244, 8
          %s246 = scalar_lea.vmem %s2, %s245
          %s247 = sadd.s32 %s17, %s18
        $region62: #{joint_edge_seg_loss.2} parent=15 // pred_fallthru
          _
      $region16: #{joint_edge_seg_loss.2} parent=5 // pred_fallthru
        _
      %p248 = scmp.le.s32.totalorder 1, %s9
      %p249 = scmp.lt.s32.totalorder %s9, 5
      %p250 = pnand %p248, %p249
      %p251 = pneg %p250
      // Predicated region
      $region63: #{joint_edge_seg_loss.2} parent=5 // pred_check
        _
      $region64: #{joint_edge_seg_loss.2} parent=5 // pred_check_branch
        %253 = sbr.rel (%p250) target = $region66
      $region65: #{joint_edge_seg_loss.2} parent=5 // pred_region
        %s254 = ssub.s32 %s9, 1
        %s255 = sand.u32 %s45, 1
        %s256 = sand.u32 %s45, 1
        %s257 = smul.addr %s256, 32
        %s258 = scalar_lea.vmem [#allocation2], %s257
        // Predicated region
        $region67: #{joint_edge_seg_loss.2} parent=65 // pred_check
          %p259 = pneg %p58
        $region68: #{joint_edge_seg_loss.2} parent=65 // pred_check_branch
          %261 = sbr.rel (%p259) target = $region70
        $region69: #{joint_edge_seg_loss.2} parent=65 // pred_region
          _
        $region70: #{joint_edge_seg_loss.2} parent=65 // pred_fallthru
          _
        %s262 = sand.u32 %s45, 1
        %s263 = sand.u32 %s45, 1
        %s264 = smul.addr %s263, 32
        %s265 = scalar_lea.vmem [#allocation2], %s264
        %p266 = pneg %p58
        %p267 = pneg %p55
        %s268 = sadd.s32 %s20, %s21
        %p269 = scmp.lt.s32.totalorder %s19, 1
        %s270 = scalar_select %p269, %s19, 1
        %p271 = scmp.lt.s32.totalorder %s268, 1
        %s272 = scalar_select %p271, %s268, 1
        %s273 = smul.addr %s270, 2
        %s274 = sadd.s32 %s272, %s273
        %s275 = smul.addr %s274, 8
        %s276 = scalar_lea.vmem %s1, %s275
        %p277 = pneg %p88
        %p278 = pneg %p85
        %s279 = sadd.s32 %s20, %s21
        %p280 = scmp.lt.s32.totalorder %s19, 1
        %s281 = scalar_select %p280, %s19, 1
        %p282 = scmp.lt.s32.totalorder %s279, 1
        %s283 = scalar_select %p282, %s279, 1
        %s284 = smul.addr %s281, 2
        %s285 = sadd.s32 %s283, %s284
        %s286 = smul.addr %s285, 8
        %s287 = scalar_lea.vmem %s2, %s286
        %p288 = pneg %p118
        %p289 = pneg %p115
        %p290 = pneg %p146
        %p291 = pneg %p143
        %p292 = scmp.lt.s32.totalorder %s19, 1
        %s293 = scalar_select %p292, %s19, 1
        %p294 = scmp.lt.s32.totalorder %s20, 1
        %s295 = scalar_select %p294, %s20, 1
        %s296 = smul.addr %s295, 2
        %s297 = smul.addr %s293, 4
        %s298 = sadd.s32 %s296, %s297
        %s299 = smul.addr %s298, 8
        %s300 = scalar_lea.vmem %s3, %s299
        %s301 = sadd.s32 %s20, %s21
        %s302 = sadd.s32 %s20, %s21
        %p303 = scmp.lt.s32.totalorder %s19, 1
        %s304 = scalar_select %p303, %s19, 1
        %p305 = scmp.lt.s32.totalorder %s302, 1
        %s306 = scalar_select %p305, %s302, 1
        %s307 = smul.addr %s304, 2
        %s308 = sadd.s32 %s306, %s307
        %s309 = smul.addr %s308, 8
        %s310 = scalar_lea.vmem %s1, %s309
        %s311 = sadd.s32 %s20, %s21
        %s312 = sadd.s32 %s20, %s21
        %p313 = scmp.lt.s32.totalorder %s19, 1
        %s314 = scalar_select %p313, %s19, 1
        %p315 = scmp.lt.s32.totalorder %s312, 1
        %s316 = scalar_select %p315, %s312, 1
        %s317 = smul.addr %s314, 2
        %s318 = sadd.s32 %s316, %s317
        %s319 = smul.addr %s318, 8
        %s320 = scalar_lea.vmem %s2, %s319
        %s321 = sadd.s32 %s20, %s21
        %p322 = scmp.lt.s32.totalorder %s19, 1
        %s323 = scalar_select %p322, %s19, 1
        %p324 = scmp.lt.s32.totalorder %s20, 1
        %s325 = scalar_select %p324, %s20, 1
        %s326 = smul.addr %s325, 2
        %s327 = smul.addr %s323, 4
        %s328 = sadd.s32 %s326, %s327
        %s329 = smul.addr %s328, 8
        %s330 = scalar_lea.vmem %s3, %s329
        %p331 = scmp.eq.s32.totalorder %s21, 0
        // Predicated region
        $region71: #{joint_edge_seg_loss.2} parent=65 // pred_check
          %p332 = pneg %p331
        $region72: #{joint_edge_seg_loss.2} parent=65 // pred_check_branch
          %334 = sbr.rel (%p332) target = $region74
        $region73: #{joint_edge_seg_loss.2} parent=65 // pred_region
          %335 = vst [vmem:[%s330] sm:$0xff] 0.0
          %336 = vst [vmem:[%s330 + $0x8] sm:$0xff] 0.0
        $region74: #{joint_edge_seg_loss.2} parent=65 // pred_fallthru
          _
        %v337 = vld [vmem:[%s310] sm:$0xff]
        %v338 = vld [vmem:[%s320] sm:$0xff]
        %vm339 = vcmp.gt.f32.partialorder %v338, 0.8
        %v340 = vsel %vm339, 1, 0
        %v341 = vcvt.s32.f32 %v340
        %v342 = vld [vmem:[%s258] sm:$0xff]
        %s343 = scalar_lea.vmem %s258, 8 [#allocation2]
        %v344 = vld [vmem:[%s343] sm:$0xff]
        %s345 = scalar_lea.vmem %s258, 16 [#allocation2]
        %v346 = vld [vmem:[%s345] sm:$0xff]
        %s347 = scalar_lea.vmem %s258, 24 [#allocation2]
        %v348 = vld [vmem:[%s347] sm:$0xff]
        %v349 = vmax.f32 %v342, %v344
        %v350 = vmax.f32 %v349, %v346
        %v351 = vmax.f32 %v350, %v348
        %v352 = vsub.f32 %v342, %v351
        %v353 = vmul.f32 %v352, 1.442695
        %v354 = vpow.pop %v353
        %v355 = vsub.f32 %v344, %v351
        %v356 = vmul.f32 %v355, 1.442695
        %v357 = vpow.pop %v356
        %v358 = vadd.f32 %v354, %v357
        %v359 = vsub.f32 %v346, %v351
        %v360 = vmul.f32 %v359, 1.442695
        %v361 = vpow.pop %v360
        %v362 = vadd.f32 %v358, %v361
        %v363 = vsub.f32 %v348, %v351
        %v364 = vmul.f32 %v363, 1.442695
        %v365 = vpow.pop %v364
        %v366 = vadd.f32 %v362, %v365
        %v367 = vlog2.pop %v366
        %v368 = vmul.f32 %v367, 0.6931472
        %v369 = vadd.f32 %v368, %v351
        %vm370 = vcmp.eq.s32.totalorder %v337, 0
        %v371 = vsel %vm370, 1, 0
        %v372 = vcvt.s32.f32 %v371
        %v373 = vsub.f32 %v369, %v342
        %v374 = vmul.f32 %v373, %v372
        %v375 = vrot.slane %v374, 4
        %v376 = vadd.f32 %v374, %v375
        %v377 = vrot.slane %v376, 2
        %v378 = vadd.f32 %v376, %v377
        %v379 = vrot.slane %v378, 1
        %v380 = vadd.f32 %v378, %v379
        %v381 = vrot.slane %v372, 4
        %v382 = vadd.f32 %v372, %v381
        %v383 = vrot.slane %v382, 2
        %v384 = vadd.f32 %v382, %v383
        %v385 = vrot.slane %v384, 1
        %v386 = vadd.f32 %v384, %v385
        %v387 = vmul.f32 %v374, %v341
        %v388 = vrot.slane %v387, 4
        %v389 = vadd.f32 %v387, %v388
        %v390 = vrot.slane %v389, 2
        %v391 = vadd.f32 %v389, %v390
        %v392 = vrot.slane %v391, 1
        %v393 = vadd.f32 %v391, %v392
        %v394 = vmul.f32 %v372, %v341
        %v395 = vrot.slane %v394, 4
        %v396 = vadd.f32 %v394, %v395
        %v397 = vrot.slane %v396, 2
        %v398 = vadd.f32 %v396, %v397
        %v399 = vrot.slane %v398, 1
        %v400 = vadd.f32 %v398, %v399
        %vm401 = vcmp.eq.s32.totalorder %v337, 1
        %v402 = vsel %vm401, 1, 0
        %v403 = vcvt.s32.f32 %v402
        %v404 = vsub.f32 %v369, %v344
        %v405 = vmul.f32 %v404, %v403
        %v406 = vrot.slane %v405, 4
        %v407 = vadd.f32 %v405, %v406
        %v408 = vrot.slane %v407, 2
        %v409 = vadd.f32 %v407, %v408
        %v410 = vrot.slane %v409, 1
        %v411 = vadd.f32 %v409, %v410
        %v412 = vrot.slane %v403, 4
        %v413 = vadd.f32 %v403, %v412
        %v414 = vrot.slane %v413, 2
        %v415 = vadd.f32 %v413, %v414
        %v416 = vrot.slane %v415, 1
        %v417 = vadd.f32 %v415, %v416
        %v418 = vmul.f32 %v405, %v341
        %v419 = vrot.slane %v418, 4
        %v420 = vadd.f32 %v418, %v419
        %v421 = vrot.slane %v420, 2
        %v422 = vadd.f32 %v420, %v421
        %v423 = vrot.slane %v422, 1
        %v424 = vadd.f32 %v422, %v423
        %v425 = vmul.f32 %v403, %v341
        %v426 = vrot.slane %v425, 4
        %v427 = vadd.f32 %v425, %v426
        %v428 = vrot.slane %v427, 2
        %v429 = vadd.f32 %v427, %v428
        %v430 = vrot.slane %v429, 1
        %v431 = vadd.f32 %v429, %v430
        %vm432 = vcmp.eq.s32.totalorder %v337, 2
        %v433 = vsel %vm432, 1, 0
        %v434 = vcvt.s32.f32 %v433
        %v435 = vsub.f32 %v369, %v346
        %v436 = vmul.f32 %v435, %v434
        %v437 = vrot.slane %v436, 4
        %v438 = vadd.f32 %v436, %v437
        %v439 = vrot.slane %v438, 2
        %v440 = vadd.f32 %v438, %v439
        %v441 = vrot.slane %v440, 1
        %v442 = vadd.f32 %v440, %v441
        %v443 = vrot.slane %v434, 4
        %v444 = vadd.f32 %v434, %v443
        %v445 = vrot.slane %v444, 2
        %v446 = vadd.f32 %v444, %v445
        %v447 = vrot.slane %v446, 1
        %v448 = vadd.f32 %v446, %v447
        %v449 = vmul.f32 %v436, %v341
        %v450 = vrot.slane %v449, 4
        %v451 = vadd.f32 %v449, %v450
        %v452 = vrot.slane %v451, 2
        %v453 = vadd.f32 %v451, %v452
        %v454 = vrot.slane %v453, 1
        %v455 = vadd.f32 %v453, %v454
        %v456 = vmul.f32 %v434, %v341
        %v457 = vrot.slane %v456, 4
        %v458 = vadd.f32 %v456, %v457
        %v459 = vrot.slane %v458, 2
        %v460 = vadd.f32 %v458, %v459
        %v461 = vrot.slane %v460, 1
        %v462 = vadd.f32 %v460, %v461
        %vm463 = vcmp.eq.s32.totalorder %v337, 3
        %v464 = vsel %vm463, 1, 0
        %v465 = vcvt.s32.f32 %v464
        %v466 = vsub.f32 %v369, %v348
        %v467 = vmul.f32 %v466, %v465
        %v468 = vrot.slane %v467, 4
        %v469 = vadd.f32 %v467, %v468
        %v470 = vrot.slane %v469, 2
        %v471 = vadd.f32 %v469, %v470
        %v472 = vrot.slane %v471, 1
        %v473 = vadd.f32 %v471, %v472
        %v474 = vrot.slane %v465, 4
        %v475 = vadd.f32 %v465, %v474
        %v476 = vrot.slane %v475, 2
        %v477 = vadd.f32 %v475, %v476
        %v478 = vrot.slane %v477, 1
        %v479 = vadd.f32 %v477, %v478
        %v480 = vmul.f32 %v467, %v341
        %v481 = vrot.slane %v480, 4
        %v482 = vadd.f32 %v480, %v481
        %v483 = vrot.slane %v482, 2
        %v484 = vadd.f32 %v482, %v483
        %v485 = vrot.slane %v484, 1
        %v486 = vadd.f32 %v484, %v485
        %v487 = vmul.f32 %v465, %v341
        %v488 = vrot.slane %v487, 4
        %v489 = vadd.f32 %v487, %v488
        %v490 = vrot.slane %v489, 2
        %v491 = vadd.f32 %v489, %v490
        %v492 = vrot.slane %v491, 1
        %v493 = vadd.f32 %v491, %v492
        %vm494 = vcmask 1040384
        %v495 = vsel %vm494, %v380, %v411
        %vm496 = vcmask 1041408
        %v497 = vsel %vm496, %v495, %v442
        %vm498 = vcmask 1042432
        %v499 = vsel %vm498, %v497, %v473
        %vm500 = vcmask 1043456
        %v501 = vsel %vm500, %v499, %v386
        %vm502 = vcmask 1044480
        %v503 = vsel %vm502, %v501, %v417
        %vm504 = vcmask 1045504
        %v505 = vsel %vm504, %v503, %v448
        %vm506 = vcmask 1046528
        %v507 = vsel %vm506, %v505, %v479
        %v508 = vsel %vm494, %v393, %v424
        %v509 = vsel %vm496, %v508, %v455
        %v510 = vsel %vm498, %v509, %v486
        %v511 = vsel %vm500, %v510, %v400
        %v512 = vsel %vm502, %v511, %v431
        %v513 = vsel %vm504, %v512, %v462
        %v514 = vsel %vm506, %v513, %v493
        %v515 = vld [vmem:[%s330] sm:$0xff]
        %v516 = vld [vmem:[%s330 + $0x8] sm:$0xff]
        %v517 = vadd.f32 %v515, %v507
        %v518 = vadd.f32 %v516, %v514
        %519 = vst [vmem:[%s330] sm:$0xff] %v517
        %520 = vst [vmem:[%s330 + $0x8] sm:$0xff] %v518
        %p521 = scmp.lt.s32.totalorder %s19, 1
        %s522 = scalar_select %p521, %s19, 1
        %p523 = scmp.lt.s32.totalorder %s20, 1
        %s524 = scalar_select %p523, %s20, 1
        %s525 = smul.addr %s524, 2
        %s526 = smul.addr %s522, 4
        %s527 = sadd.s32 %s525, %s526
        %s528 = smul.addr %s527, 8
        %s529 = scalar_lea.vmem %s3, %s528
        // Predicated region
        $region75: #{joint_edge_seg_loss.2} parent=65 // pred_check
          %p530 = pneg %p143
        $region76: #{joint_edge_seg_loss.2} parent=65 // pred_check_branch
          %532 = sbr.rel (%p530) target = $region78
        $region77: #{joint_edge_seg_loss.2} parent=65 // pred_region
          _
        $region78: #{joint_edge_seg_loss.2} parent=65 // pred_fallthru
          _
      $region66: #{joint_edge_seg_loss.2} parent=5 // pred_fallthru
        _
      %p533 = scmp.le.s32.totalorder 2, %s9
      // Predicated region
      $region79: #{joint_edge_seg_loss.2} parent=5 // pred_check
        %p534 = pneg %p533
      $region80: #{joint_edge_seg_loss.2} parent=5 // pred_check_branch
        %536 = sbr.rel (%p534) target = $region82
      $region81: #{joint_edge_seg_loss.2} parent=5 // pred_region
        %s537 = ssub.s32 %s9, 2
        // Predicated region
        $region83: #{joint_edge_seg_loss.2} parent=81 // pred_check
          %p538 = pneg %p149
        $region84: #{joint_edge_seg_loss.2} parent=81 // pred_check_branch
          %540 = sbr.rel (%p538) target = $region86
        $region85: #{joint_edge_seg_loss.2} parent=81 // pred_region
          %p541 = scmp.lt.s32.totalorder %s22, 1
          %s542 = scalar_select %p541, %s22, 1
          %p543 = scmp.lt.s32.totalorder %s23, 1
          %s544 = scalar_select %p543, %s23, 1
          %s545 = smul.addr %s544, 2
          %s546 = smul.addr %s542, 4
          %s547 = sadd.s32 %s545, %s546
          %s548 = smul.addr %s547, 8
          %s549 = scalar_lea.vmem %s3, %s548
        $region86: #{joint_edge_seg_loss.2} parent=81 // pred_fallthru
          _
      $region82: #{joint_edge_seg_loss.2} parent=5 // pred_fallthru
        _
    $region6: #{joint_edge_seg_loss.2} parent=1 // loop_footer
      %s13 = sadd.s32 1, %s9
    $region7: #{joint_edge_seg_loss.2} parent=1 // loop_footer_branch
      %8 = sbr.rel target = $region3
    $region8: #{joint_edge_seg_loss.2} parent=1 // loop_exit
      _

// kernel: joint_edge_seg_loss.3
$region0: #{joint_edge_seg_loss.3}
  #allocation0 [shape = 'u32[]', space=smem, size = 0x4, offset = 0x4, fixed_abs, tag = 'smem constant byte address 0x4 - core index']
  #allocation1 [shape = 'u32[72,128]{1,0:T(1,128)}', space=vmem, size = 0x9000, scoped, tag = 'internal scratch']
  %s0 = inlined_call_operand.vmem [shape: f32[2,8,128], index: 0, kind: input, shape index: {}]
  %s1 = inlined_call_operand.vmem [shape: f32[2,8,128], index: 1, kind: input, shape index: {}]
  %s2 = inlined_call_operand.vmem [shape: f32[2,4,128], index: 2, kind: output, shape index: {}]
  %s3 = sld [smem:[#allocation0]]
  $region45: #{joint_edge_seg_loss.3} parent=0
    _
  %s5 = ssub.s32 1, %s3
  %s6 = scalar_select 0, %s5, %s3
  loop: start=0, step=1, limit=4
  $region2: #{joint_edge_seg_loss.3} parent=0 // loop_pre_header
    _
  $region3: #{joint_edge_seg_loss.3} parent=0 // loop_header
    %s8 = sphi 0, %s12
    %p9 = scmp.ge.s32.totalorder %s8, 4
    %s15 = sphi 0, %s27
    %s16 = sphi 0, %s23
    %s17 = sphi 0, %s15
    %s18 = sphi 0, %s16
    %s19 = sphi 0, %s17
    %s20 = sphi 0, %s18
    %s32 = sphi 0, %s34
    %s35 = sphi 0, %s32
    %s36 = sphi 0, %s35
    %s52 = sphi 0, %s36
    %s60 = sphi 0, %s62
    %s63 = sphi 0, %s60
    %s64 = sphi 0, %s63
    %s80 = sphi 0, %s64
    %s86 = sphi 0, %s88
    %s89 = sphi 0, %s86
    %s90 = sphi 0, %s89
    %s106 = sphi 0, %s90
  $region4: #{joint_edge_seg_loss.3} parent=0 // loop_header_branch
    %11 = sbr.rel (%p9) target = $region8
  $region5: #{joint_edge_seg_loss.3} parent=0 // loop_body
    %s13 = ssub.s32 %s8, 1
    %s14 = ssub.s32 %s8, 2
    %s21 = sadd.s32 1, %s16
    %p22 = scmp.ge.s32.totalorder %s21, 1
    %s23 = scalar_select %p22, 0, %s21
    %s24 = sadd.s32 1, %s15
    %s25 = scalar_select %p22, %s24, %s15
    %p26 = scmp.ge.s32.totalorder %s25, 2
    %s27 = scalar_select %p26, 0, %s25
    %s28 = ssub.s32 %s15, %s27
    %s29 = ssub.s32 %s16, %s23
    %s30 = sor.u32 %s28, %s29
    %p31 = scmp.eq.s32.totalorder %s30, 0
    %s33 = sadd.s32 %s32, 1
    %s34 = scalar_select %p31, %s32, %s33
    %p37 = pneg %p31
    %p38 = scmp.eq.s32.totalorder %s8, 1
    %p39 = por %p37, %p38
    %p40 = scmp.ne.s32.totalorder %s32, %s35
    %p41 = scmp.eq.s32.totalorder %s8, 0
    %p42 = por %p40, %p41
    %p43 = scmp.ne.s32.totalorder %s32, %s35
    %p44 = scmp.eq.s32.totalorder %s13, 1
    %p45 = por %p43, %p44
    %p46 = scmp.ne.s32.totalorder %s35, %s36
    %p47 = scmp.eq.s32.totalorder %s13, 0
    %p48 = por %p46, %p47
    %p49 = scmp.ne.s32.totalorder %s35, %s36
    %p50 = scmp.eq.s32.totalorder %s14, 1
    %p51 = por %p49, %p50
    %p53 = scmp.ne.s32.totalorder %s36, %s52
    %p54 = scmp.eq.s32.totalorder %s14, 0
    %p55 = por %p53, %p54
    %s56 = ssub.s32 %s15, %s27
    %s57 = ssub.s32 %s16, %s23
    %s58 = sor.u32 %s56, %s57
    %p59 = scmp.eq.s32.totalorder %s58, 0
    %s61 = sadd.s32 %s60, 1
    %s62 = scalar_select %p59, %s60, %s61
    %p65 = pneg %p59
    %p66 = scmp.eq.s32.totalorder %s8, 1
    %p67 = por %p65, %p66
    %p68 = scmp.ne.s32.totalorder %s60, %s63
    %p69 = scmp.eq.s32.totalorder %s8, 0
    %p70 = por %p68, %p69
    %p71 = scmp.ne.s32.totalorder %s60, %s63
    %p72 = scmp.eq.s32.totalorder %s13, 1
    %p73 = por %p71, %p72
    %p74 = scmp.ne.s32.totalorder %s63, %s64
    %p75 = scmp.eq.s32.totalorder %s13, 0
    %p76 = por %p74, %p75
    %p77 = scmp.ne.s32.totalorder %s63, %s64
    %p78 = scmp.eq.s32.totalorder %s14, 1
    %p79 = por %p77, %p78
    %p81 = scmp.ne.s32.totalorder %s64, %s80
    %p82 = scmp.eq.s32.totalorder %s14, 0
    %p83 = por %p81, %p82
    %s84 = ssub.s32 %s15, %s27
    %p85 = scmp.eq.s32.totalorder %s84, 0
    %s87 = sadd.s32 %s86, 1
    %s88 = scalar_select %p85, %s86, %s87
    %p91 = pneg %p85
    %p92 = scmp.eq.s32.totalorder %s8, 1
    %p93 = por %p91, %p92
    %p94 = scmp.ne.s32.totalorder %s86, %s89
    %p95 = scmp.eq.s32.totalorder %s8, 0
    %p96 = por %p94, %p95
    %p97 = scmp.ne.s32.totalorder %s86, %s89
    %p98 = scmp.eq.s32.totalorder %s13, 1
    %p99 = por %p97, %p98
    %p100 = scmp.ne.s32.totalorder %s89, %s90
    %p101 = scmp.eq.s32.totalorder %s13, 0
    %p102 = por %p100, %p101
    %p103 = scmp.ne.s32.totalorder %s89, %s90
    %p104 = scmp.eq.s32.totalorder %s14, 1
    %p105 = por %p103, %p104
    %p107 = scmp.ne.s32.totalorder %s90, %s106
    %p108 = scmp.eq.s32.totalorder %s14, 0
    %p109 = por %p107, %p108
    %p110 = scmp.le.s32.totalorder 1, %s8
    %p111 = scmp.lt.s32.totalorder %s8, 3
    %p112 = pnand %p110, %p111
    %p113 = pneg %p112
    // Predicated region
    $region9: #{joint_edge_seg_loss.3} parent=5 // pred_check
      _
    $region10: #{joint_edge_seg_loss.3} parent=5 // pred_check_branch
      %115 = sbr.rel (%p112) target = $region12
    $region11: #{joint_edge_seg_loss.3} parent=5 // pred_region
      %s116 = ssub.s32 %s8, 1
    $region12: #{joint_edge_seg_loss.3} parent=5 // pred_fallthru
      _
    %p117 = scmp.lt.s32.totalorder %s8, 2
    // Predicated region
    $region13: #{joint_edge_seg_loss.3} parent=5 // pred_check
      %p118 = pneg %p117
    $region14: #{joint_edge_seg_loss.3} parent=5 // pred_check_branch
      %120 = sbr.rel (%p118) target = $region16
    $region15: #{joint_edge_seg_loss.3} parent=5 // pred_region
      // Predicated region
      $region17: #{joint_edge_seg_loss.3} parent=15 // pred_check
        %p121 = pneg %p42
      $region18: #{joint_edge_seg_loss.3} parent=15 // pred_check_branch
        %123 = sbr.rel (%p121) target = $region20
      $region19: #{joint_edge_seg_loss.3} parent=15 // pred_region
        %p124 = scmp.lt.s32.totalorder %s15, 1
        %s125 = scalar_select %p124, %s15, 1
        %p126 = scmp.lt.s32.totalorder %s16, 0
        %s127 = scalar_select %p126, %s16, 0
        %s128 = sadd.s32 %s127, %s125
        %s129 = smul.addr %s128, 8
        %s130 = scalar_lea.vmem %s0, %s129
      $region20: #{joint_edge_seg_loss.3} parent=15 // pred_fallthru
        _
      // Predicated region
      $region21: #{joint_edge_seg_loss.3} parent=15 // pred_check
        %p131 = pneg %p70
      $region22: #{joint_edge_seg_loss.3} parent=15 // pred_check_branch
        %133 = sbr.rel (%p131) target = $region24
      $region23: #{joint_edge_seg_loss.3} parent=15 // pred_region
        %p134 = scmp.lt.s32.totalorder %s15, 1
        %s135 = scalar_select %p134, %s15, 1
        %p136 = scmp.lt.s32.totalorder %s16, 0
        %s137 = scalar_select %p136, %s16, 0
        %s138 = sadd.s32 %s137, %s135
        %s139 = smul.addr %s138, 8
        %s140 = scalar_lea.vmem %s1, %s139
      $region24: #{joint_edge_seg_loss.3} parent=15 // pred_fallthru
        _
    $region16: #{joint_edge_seg_loss.3} parent=5 // pred_fallthru
      _
    %p141 = scmp.le.s32.totalorder 1, %s8
    %p142 = scmp.lt.s32.totalorder %s8, 3
    %p143 = pnand %p141, %p142
    %p144 = pneg %p143
    // Predicated region
    $region25: #{joint_edge_seg_loss.3} parent=5 // pred_check
      _
    $region26: #{joint_edge_seg_loss.3} parent=5 // pred_check_branch
      %146 = sbr.rel (%p143) target = $region28
    $region27: #{joint_edge_seg_loss.3} parent=5 // pred_region
      %s147 = ssub.s32 %s8, 1
      %p148 = scmp.lt.s32.totalorder %s17, 1
      %s149 = scalar_select %p148, %s17, 1
      %p150 = scmp.lt.s32.totalorder %s18, 0
      %s151 = scalar_select %p150, %s18, 0
      %s152 = sadd.s32 %s151, %s149
      %s153 = smul.addr %s152, 8
      %s154 = scalar_lea.vmem %s0, %s153
      %p155 = pneg %p48
      %p156 = pneg %p45
      %p157 = scmp.lt.s32.totalorder %s17, 1
      %s158 = scalar_select %p157, %s17, 1
      %p159 = scmp.lt.s32.totalorder %s18, 0
      %s160 = scalar_select %p159, %s18, 0
      %s161 = sadd.s32 %s160, %s158
      %s162 = smul.addr %s161, 8
      %s163 = scalar_lea.vmem %s1, %s162
      %p164 = pneg %p76
      %p165 = pneg %p73
      %p166 = pneg %p102
      %p167 = pneg %p99
      %p168 = scmp.lt.s32.totalorder %s17, 1
      %s169 = scalar_select %p168, %s17, 1
      %s170 = smul.addr %s169, 4
      %s171 = scalar_lea.vmem %s2, %s170
      %p172 = scmp.lt.s32.totalorder %s17, 1
      %s173 = scalar_select %p172, %s17, 1
      %p174 = scmp.lt.s32.totalorder %s18, 0
      %s175 = scalar_select %p174, %s18, 0
      %s176 = sadd.s32 %s175, %s173
      %s177 = smul.addr %s176, 8
      %s178 = scalar_lea.vmem %s0, %s177
      %p179 = scmp.lt.s32.totalorder %s17, 1
      %s180 = scalar_select %p179, %s17, 1
      %p181 = scmp.lt.s32.totalorder %s18, 0
      %s182 = scalar_select %p181, %s18, 0
      %s183 = sadd.s32 %s182, %s180
      %s184 = smul.addr %s183, 8
      %s185 = scalar_lea.vmem %s1, %s184
      %p186 = scmp.lt.s32.totalorder %s17, 1
      %s187 = scalar_select %p186, %s17, 1
      %s188 = smul.addr %s187, 4
      %s189 = scalar_lea.vmem %s2, %s188
      %p190 = scmp.eq.s32.totalorder %s18, 0
      // Predicated region
      $region29: #{joint_edge_seg_loss.3} parent=27 // pred_check
        %p191 = pneg %p190
      $region30: #{joint_edge_seg_loss.3} parent=27 // pred_check_branch
        %193 = sbr.rel (%p191) target = $region32
      $region31: #{joint_edge_seg_loss.3} parent=27 // pred_region
        %194 = vst [vmem:[%s189] sm:$0xf] 0.0
      $region32: #{joint_edge_seg_loss.3} parent=27 // pred_fallthru
        _
      %v195 = vld [vmem:[%s178] sm:$0xff]
      %v196 = vld [vmem:[%s185] sm:$0xff]
      %vm197 = vcmp.eq.f32.partialorder %v196, 1.0
      %v198 = vsel %vm197, 1, 0
      %v199 = vcvt.s32.f32 %v198
      %vm200 = vcmp.eq.f32.partialorder %v196, 0.0
      %v201 = vsel %vm200, 1, 0
      %v202 = vcvt.s32.f32 %v201
      %v203 = vand.u32 2147483647, %v195
      %v204 = vsub.f32 0.0, %v203
      %v205 = vmul.f32 %v204, 1.442695
      %v206 = vpow.pop %v205
      %v207 = vadd.f32 %v206, 1.0
      %v208 = vlog2.pop %v207
      %v209 = vmul.f32 %v208, 0.6931472
      %v210 = vsub.f32 0.0, %v195
      %v211 = vmax.f32 %v210, 0.0
      %v212 = vadd.f32 %v211, %v209
      %v213 = vmax.f32 %v195, 0.0
      %v214 = vadd.f32 %v213, %v209
      %v215 = vrot.slane %v199, 4
      %v216 = vadd.f32 %v199, %v215
      %v217 = vrot.slane %v216, 2
      %v218 = vadd.f32 %v216, %v217
      %v219 = vrot.slane %v218, 1
      %v220 = vadd.f32 %v218, %v219
      %v221 = vrot.slane %v202, 4
      %v222 = vadd.f32 %v202, %v221
      %v223 = vrot.slane %v222, 2
      %v224 = vadd.f32 %v222, %v223
      %v225 = vrot.slane %v224, 1
      %v226 = vadd.f32 %v224, %v225
      %v227 = vmul.f32 %v199, %v212
      %v228 = vrot.slane %v227, 4
      %v229 = vadd.f32 %v227, %v228
      %v230 = vrot.slane %v229, 2
      %v231 = vadd.f32 %v229, %v230
      %v232 = vrot.slane %v231, 1
      %v233 = vadd.f32 %v231, %v232
      %v234 = vmul.f32 %v202, %v214
      %v235 = vrot.slane %v234, 4
      %v236 = vadd.f32 %v234, %v235
      %v237 = vrot.slane %v236, 2
      %v238 = vadd.f32 %v236, %v237
      %v239 = vrot.slane %v238, 1
      %v240 = vadd.f32 %v238, %v239
      %vm241 = vcmask 1040384
      %v242 = vsel %vm241, %v220, %v226
      %vm243 = vcmask 1041408
      %v244 = vsel %vm243, %v242, %v233
      %vm245 = vcmask 1042432
      %v246 = vsel %vm245, %v244, %v240
      %v247 = vld [vmem:[%s189] sm:$0xf]
      %v248 = vadd.f32 %v247, %v246
      %249 = vst [vmem:[%s189] sm:$0xf] %v248
      %p250 = scmp.lt.s32.totalorder %s17, 1
      %s251 = scalar_select %p250, %s17, 1
      %s252 = smul.addr %s251, 4
      %s253 = scalar_lea.vmem %s2, %s252
      // Predicated region
      $region33: #{joint_edge_seg_loss.3} parent=27 // pred_check
        %p254 = pneg %p99
      $region34: #{joint_edge_seg_loss.3} parent=27 // pred_check_branch
        %256 = sbr.rel (%p254) target = $region36
      $region35: #{joint_edge_seg_loss.3} parent=27 // pred_region
        _
      $region36: #{joint_edge_seg_loss.3} parent=27 // pred_fallthru
        _
    $region28: #{joint_edge_seg_loss.3} parent=5 // pred_fallthru
      _
    %p257 = scmp.le.s32.totalorder 2, %s8
    // Predicated region
    $region37: #{joint_edge_seg_loss.3} parent=5 // pred_check
      %p258 = pneg %p257
    $region38: #{joint_edge_seg_loss.3} parent=5 // pred_check_branch
      %260 = sbr.rel (%p258) target = $region40
    $region39: #{joint_edge_seg_loss.3} parent=5 // pred_region
      %s261 = ssub.s32 %s8, 2
      // Predicated region
      $region41: #{joint_edge_seg_loss.3} parent=39 // pred_check
        %p262 = pneg %p105
      $region42: #{joint_edge_seg_loss.3} parent=39 // pred_check_branch
        %264 = sbr.rel (%p262) target = $region44
      $region43: #{joint_edge_seg_loss.3} parent=39 // pred_region
        %p265 = scmp.lt.s32.totalorder %s19, 1
        %s266 = scalar_select %p265, %s19, 1
        %s267 = smul.addr %s266, 4
        %s268 = scalar_lea.vmem %s2, %s267
      $region44: #{joint_edge_seg_loss.3} parent=39 // pred_fallthru
        _
    $region40: #{joint_edge_seg_loss.3} parent=5 // pred_fallthru
      _
  $region6: #{joint_edge_seg_loss.3} parent=0 // loop_footer
    %s12 = sadd.s32 1, %s8
  $region7: #{joint_edge_seg_loss.3} parent=0 // loop_footer_branch
    %7 = sbr.rel target = $region3
  $region8: #{joint_edge_seg_loss.3} parent=0 // loop_exit
    _

</llo_original>
